<compile_context>
chip_gen: v5e
topology: v5e:2x2
jax: 0.10.0
libtpu: 0.0.40
codegen_flags: <defaults>
</compile_context>

<pallas_src>
import functools
import numpy as np
import jax
import jax.numpy as jnp
from jax import lax
from jax.experimental import pallas as pl
from jax.experimental.pallas import tpu as pltpu


def _dsconv_kernel(x_ref, wband_ref, bias_ref, o_ref, *, Ho, Wo, K, Cout,
                   pregathered):
    """One batch block: K banded MXU matmuls + bias, lane-dense output.

    x_ref    : (Nb, Hs, lpad)      bf16; Hs = H+2p (stride 1) or K*Ho (stride>1)
    wband_ref: (K, lpad, Wo*Cout)  bf16 banded depthwise+1x1 fused weights
    bias_ref : (1, Wo*Cout)        f32 fused bias (dw + bottleneck + pointwise)
    o_ref    : (Nb, Ho, Wo*Cout)
    """
    nb = x_ref.shape[0]
    lanes = x_ref.shape[-1]
    wc_out = Wo * Cout

    x = x_ref[...]                                       # (Nb, Hs, lanes) bf16

    acc = None
    for i in range(K):
        if pregathered:
            xi = x[:, i * Ho:(i + 1) * Ho, :]            # rows pre-gathered
        else:
            xi = x[:, i:i + Ho, :]                       # stride-1 H tap
        xi = xi.reshape(nb * Ho, lanes)
        contrib = jnp.dot(xi, wband_ref[i],
                          preferred_element_type=jnp.float32)
        acc = contrib if acc is None else acc + contrib

    z = acc + bias_ref[...]                              # (Nb*Ho, Wo*Cout) f32
    o_ref[...] = z.reshape(nb, Ho, wc_out).astype(o_ref.dtype)


def depthwise_separable_conv(x_nchw, params, *, kernel_size=3, stride=1,
                             padding=1, groups=4, batch_block=None):
    """params = (wd, bd, wb, bb, wp, bp) in PyTorch Conv2d weight layouts."""
    wd, bd, wb, bb, wp, bp = params
    N, Cin, H, W = x_nchw.shape
    Cb = wb.shape[0]
    Cout = wp.shape[0]
    K, p, s = kernel_size, padding, stride
    assert Cb % groups == 0 and Cout % groups == 0

    Ho = (H + 2 * p - K) // s + 1
    Wo = (W + 2 * p - K) // s + 1
    lpad = ((W * Cin + 127) // 128) * 128
    wc_out = Wo * Cout
    assert W * Cin <= lpad

    # ---------- weight prep (host side, one-time) ----------
    wd_np = np.asarray(wd, np.float32)[:, 0]            # (Cin, K, K)
    wb_np = np.asarray(wb, np.float32)[:, :, 0, 0]      # (Cb, Cin)
    wp_np = np.asarray(wp, np.float32)[:, :, 0, 0]      # (Cout, Cb//groups)
    bd_np = np.asarray(bd, np.float32)
    bb_np = np.asarray(bb, np.float32)
    bp_np = np.asarray(bp, np.float32)

    # grouped pointwise as block-diagonal (Cb, Cout); fuse with bottleneck
    cbg, cog = Cb // groups, Cout // groups
    wp_bd = np.zeros((Cb, Cout), np.float32)
    for g in range(groups):
        wp_bd[g * cbg:(g + 1) * cbg, g * cog:(g + 1) * cog] = \
            wp_np[g * cog:(g + 1) * cog, :].T
    w_fused = wb_np.T @ wp_bd                            # (Cin, Cout)
    b_fused = bd_np @ w_fused + bb_np @ wp_bd + bp_np    # (Cout,)

    # banded weights: depthwise taps + W padding + W stride folded into the 1x1
    w_band = np.zeros((K, lpad, wc_out), np.float32)
    for i in range(K):
        for wo_ in range(Wo):
            for j in range(K):
                wi = wo_ * s + j - p
                if 0 <= wi < W:
                    w_band[i, wi * Cin:(wi + 1) * Cin,
                           wo_ * Cout:(wo_ + 1) * Cout] = \
                        wd_np[:, i, j][:, None] * w_fused
    w_band = jnp.asarray(w_band, jnp.bfloat16)
    b_tile = jnp.asarray(np.tile(b_fused, Wo).reshape(1, wc_out), jnp.float32)

    # ---------- activation packing: NCHW -> (N, H+2p, W*Cin) bf16 ----------
    x = jnp.transpose(x_nchw, (0, 2, 3, 1)).reshape(N, H, W * Cin)
    x = jnp.pad(x, ((0, 0), (p, p), (0, lpad - W * Cin))).astype(jnp.bfloat16)
    Hp = H + 2 * p

    if s == 1:
        x_in, Hs = x, Hp
    else:
        # gather exactly the K*Ho rows the strided H-taps read (no s^2 waste)
        rows = (np.arange(K)[:, None] + s * np.arange(Ho)[None, :]).reshape(-1)
        x_in = x[:, jnp.asarray(rows), :]
        Hs = K * Ho

    # ---------- batch blocking ----------
    nb = batch_block
    if nb is None:
        want = max(1, -(-128 // Ho))                 # Nb giving MXU M >= 128
        nb = min(want, max(1, N // 2)) if N >= 2 else 1   # keep >=2 grid steps
        while N % nb:
            nb -= 1
    if N % nb:
        raise ValueError(f"batch_block {nb} must divide batch {N}")
    grid = (N // nb,)

    kernel = functools.partial(_dsconv_kernel, Ho=Ho, Wo=Wo, K=K, Cout=Cout,
                               pregathered=(s != 1))

    flops = 2 * K * N * Ho * lpad * wc_out
    bytes_accessed = (N * Hs * lpad * 2 + K * lpad * wc_out * 2 + wc_out * 4
                      + N * Ho * wc_out * np.dtype(x_nchw.dtype).itemsize)

    out_packed = pl.pallas_call(
        kernel,
        out_shape=jax.ShapeDtypeStruct((N, Ho, wc_out), x_nchw.dtype),
        grid_spec=pltpu.PrefetchScalarGridSpec(
            num_scalar_prefetch=0,
            grid=grid,
            in_specs=[
                pl.BlockSpec((nb, Hs, lpad), lambda n: (n, 0, 0)),
                pl.BlockSpec((K, lpad, wc_out), lambda n: (0, 0, 0)),
                pl.BlockSpec((1, wc_out), lambda n: (0, 0)),
            ],
            out_specs=pl.BlockSpec((nb, Ho, wc_out), lambda n: (n, 0, 0)),
        ),
        compiler_params=pltpu.CompilerParams(
            dimension_semantics=("parallel",)),
        cost_estimate=pl.CostEstimate(flops=flops, transcendentals=0,
                                      bytes_accessed=bytes_accessed),
    )(x_in, w_band, b_tile)

    out = out_packed.reshape(N, Ho, Wo, Cout)
    return jnp.transpose(out, (0, 3, 1, 2))              # back to NCHW


def reference(x_nchw, params, *, kernel_size=3, stride=1, padding=1, groups=4):
    """Pure-JAX reference matching nn.Conv2d semantics (NCHW)."""
    del kernel_size
    wd, bd, wb, bb, wp, bp = params
    Cin = x_nchw.shape[1]
    dn = ('NCHW', 'OIHW', 'NCHW')
    y = lax.conv_general_dilated(x_nchw, wd, (stride, stride),
                                 ((padding, padding), (padding, padding)),
                                 dimension_numbers=dn,
                                 feature_group_count=Cin)
    y = y + bd[None, :, None, None]
    y = lax.conv_general_dilated(y, wb, (1, 1), ((0, 0), (0, 0)),
                                 dimension_numbers=dn)
    y = y + bb[None, :, None, None]
    y = lax.conv_general_dilated(y, wp, (1, 1), ((0, 0), (0, 0)),
                                 dimension_numbers=dn,
                                 feature_group_count=groups)
    y = y + bp[None, :, None, None]
    return y


if __name__ == "__main__":
    # Module hyperparameters (consistent with the PyTorch __init__).
    in_channels, out_channels = 8, 8
    kernel_size, stride, padding = 3, 1, 1
    bottleneck_ratio, groups = 0.5, 4
    bottleneck_channels = int(in_channels * bottleneck_ratio)   # 4

    N, H, W = 2, 16, 16

    key = jax.random.PRNGKey(0)
    k = jax.random.split(key, 7)
    x = jax.random.normal(k[0], (N, in_channels, H, W), jnp.float32)

    # Deterministic parameter init in PyTorch conv shapes.
    wd = 0.1 * jax.random.normal(
        k[1], (in_channels, 1, kernel_size, kernel_size), jnp.float32)
    bd = 0.1 * jax.random.normal(k[2], (in_channels,), jnp.float32)
    wb = 0.1 * jax.random.normal(
        k[3], (bottleneck_channels, in_channels, 1, 1), jnp.float32)
    bb = 0.1 * jax.random.normal(k[4], (bottleneck_channels,), jnp.float32)
    wp = 0.1 * jax.random.normal(
        k[5], (out_channels, bottleneck_channels // groups, 1, 1), jnp.float32)
    bp = 0.1 * jax.random.normal(k[6], (out_channels,), jnp.float32)
    params = (wd, bd, wb, bb, wp, bp)

    out = depthwise_separable_conv(x, params, kernel_size=kernel_size,
                                   stride=stride, padding=padding,
                                   groups=groups)
    out = jax.block_until_ready(out)

    ref = jax.block_until_ready(
        reference(x, params, kernel_size=kernel_size, stride=stride,
                  padding=padding, groups=groups))
    np.testing.assert_allclose(np.asarray(out), np.asarray(ref),
                               rtol=1e-2, atol=1e-2)

    print("KERNEL_OK")
</pallas_src>

<mosaic_0001>
module attributes {stable_mosaic.version = 11 : i64} {
  func.func @_dsconv_kernel(%arg0: i32, %arg1: memref<1x18x128xbf16, #tpu.memory_space<vmem>>, %arg2: memref<3x128x128xbf16, #tpu.memory_space<vmem>>, %arg3: memref<1x128xf32, #tpu.memory_space<vmem>>, %arg4: memref<1x16x128xf32, #tpu.memory_space<vmem>>) attributes {dimension_semantics = [#tpu.dimension_semantics<parallel>], iteration_bounds = array<i64: 2>, scalar_prefetch = 0 : i64, scratch_operands = 0 : i64, tpu.core_type = #tpu.core_type<tc>, window_params = [{transform_indices = @transform_0, window_bounds = array<i64: 1, 18, 128>}, {pipeline_mode = #tpu.pipeline_mode<synchronous>, transform_indices = @transform_1, window_bounds = array<i64: 3, 128, 128>}, {pipeline_mode = #tpu.pipeline_mode<synchronous>, transform_indices = @transform_2, window_bounds = array<i64: 1, 128>}, {transform_indices = @transform_3, window_bounds = array<i64: 1, 16, 128>}]} {
    %c0 = arith.constant 0 : index
    %c0_0 = arith.constant 0 : index
    %c0_1 = arith.constant 0 : index
    %0 = vector.load %arg1[%c0, %c0_0, %c0_1] : memref<1x18x128xbf16, #tpu.memory_space<vmem>>, vector<1x18x128xbf16>
    %1 = vector.extract_strided_slice %0 {offsets = [0, 0, 0], sizes = [1, 16, 128], strides = [1, 1, 1]} : vector<1x18x128xbf16> to vector<1x16x128xbf16>
    %2 = vector.shape_cast %1 : vector<1x16x128xbf16> to vector<16x128xbf16>
    %c0_2 = arith.constant 0 : index
    %c0_3 = arith.constant 0 : index
    %c0_4 = arith.constant 0 : index
    %3 = vector.load %arg2[%c0_2, %c0_3, %c0_4] : memref<3x128x128xbf16, #tpu.memory_space<vmem>>, vector<1x128x128xbf16>
    %4 = vector.shape_cast %3 : vector<1x128x128xbf16> to vector<128x128xbf16>
    %cst = arith.constant dense<0.000000e+00> : vector<16x128xf32>
    %5 = tpu.matmul %2, %4, %cst {dimension_numbers = #tpu.dot_dimension_numbers<[1], [0], [0], [1], [0, 0, 1, 1], [], []>} : vector<16x128xbf16>, vector<128x128xbf16>, vector<16x128xf32> -> vector<16x128xf32>
    %6 = vector.extract_strided_slice %0 {offsets = [0, 1, 0], sizes = [1, 16, 128], strides = [1, 1, 1]} : vector<1x18x128xbf16> to vector<1x16x128xbf16>
    %7 = vector.shape_cast %6 : vector<1x16x128xbf16> to vector<16x128xbf16>
    %c1 = arith.constant 1 : index
    %c0_5 = arith.constant 0 : index
    %c0_6 = arith.constant 0 : index
    %8 = vector.load %arg2[%c1, %c0_5, %c0_6] : memref<3x128x128xbf16, #tpu.memory_space<vmem>>, vector<1x128x128xbf16>
    %9 = vector.shape_cast %8 : vector<1x128x128xbf16> to vector<128x128xbf16>
    %cst_7 = arith.constant dense<0.000000e+00> : vector<16x128xf32>
    %10 = tpu.matmul %7, %9, %cst_7 {dimension_numbers = #tpu.dot_dimension_numbers<[1], [0], [0], [1], [0, 0, 1, 1], [], []>} : vector<16x128xbf16>, vector<128x128xbf16>, vector<16x128xf32> -> vector<16x128xf32>
    %11 = arith.addf %5, %10 : vector<16x128xf32>
    %12 = vector.extract_strided_slice %0 {offsets = [0, 2, 0], sizes = [1, 16, 128], strides = [1, 1, 1]} : vector<1x18x128xbf16> to vector<1x16x128xbf16>
    %13 = vector.shape_cast %12 : vector<1x16x128xbf16> to vector<16x128xbf16>
    %c2 = arith.constant 2 : index
    %c0_8 = arith.constant 0 : index
    %c0_9 = arith.constant 0 : index
    %14 = vector.load %arg2[%c2, %c0_8, %c0_9] : memref<3x128x128xbf16, #tpu.memory_space<vmem>>, vector<1x128x128xbf16>
    %15 = vector.shape_cast %14 : vector<1x128x128xbf16> to vector<128x128xbf16>
    %cst_10 = arith.constant dense<0.000000e+00> : vector<16x128xf32>
    %16 = tpu.matmul %13, %15, %cst_10 {dimension_numbers = #tpu.dot_dimension_numbers<[1], [0], [0], [1], [0, 0, 1, 1], [], []>} : vector<16x128xbf16>, vector<128x128xbf16>, vector<16x128xf32> -> vector<16x128xf32>
    %17 = arith.addf %11, %16 : vector<16x128xf32>
    %c0_11 = arith.constant 0 : index
    %c0_12 = arith.constant 0 : index
    %18 = vector.load %arg3[%c0_11, %c0_12] : memref<1x128xf32, #tpu.memory_space<vmem>>, vector<1x128xf32>
    %19 = vector.broadcast %18 : vector<1x128xf32> to vector<16x128xf32>
    %20 = arith.addf %17, %19 : vector<16x128xf32>
    %21 = vector.shape_cast %20 : vector<16x128xf32> to vector<1x16x128xf32>
    %c0_13 = arith.constant 0 : index
    %c0_14 = arith.constant 0 : index
    %c0_15 = arith.constant 0 : index
    %22 = vector.load %arg4[%c0_13, %c0_14, %c0_15] : memref<1x16x128xf32, #tpu.memory_space<vmem>>, vector<1x16x128xf32>
    tpu.vector_store %arg4[%c0_13, %c0_14, %c0_15], %21 {strides = array<i32>} : memref<1x16x128xf32, #tpu.memory_space<vmem>>, vector<1x16x128xf32>,
    return
  }
  func.func @transform_0(%arg0: i32) -> (i32, i32, i32) {
    %c0_i32 = arith.constant 0 : i32
    %c0_i32_0 = arith.constant 0 : i32
    %c0_i32_1 = arith.constant 0 : i32
    return %arg0, %c0_i32, %c0_i32_0 : i32, i32, i32
  }
  func.func @transform_1(%arg0: i32) -> (i32, i32, i32) {
    %c0_i32 = arith.constant 0 : i32
    %c0_i32_0 = arith.constant 0 : i32
    %c0_i32_1 = arith.constant 0 : i32
    %c0_i32_2 = arith.constant 0 : i32
    return %c0_i32, %c0_i32_0, %c0_i32_1 : i32, i32, i32
  }
  func.func @transform_2(%arg0: i32) -> (i32, i32) {
    %c0_i32 = arith.constant 0 : i32
    %c0_i32_0 = arith.constant 0 : i32
    %c0_i32_1 = arith.constant 0 : i32
    return %c0_i32, %c0_i32_0 : i32, i32
  }
  func.func @transform_3(%arg0: i32) -> (i32, i32, i32) {
    %c0_i32 = arith.constant 0 : i32
    %c0_i32_0 = arith.constant 0 : i32
    %c0_i32_1 = arith.constant 0 : i32
    return %arg0, %c0_i32, %c0_i32_0 : i32, i32, i32
  }
}

</mosaic_0001>

<llo_original>
// kernel: tpu_custom_call.1
$region0: #{tpu_custom_call.1}
  #allocation0 [shape = 'u32[]', space=smem, size = 0x4, offset = 0x4, fixed_abs, tag = 'smem constant byte address 0x4 - core index']
  #allocation1 [shape = 'u32[72,128]{1,0:T(1,128)}', space=vmem, size = 0x9000, scoped, tag = 'internal scratch']
  %s0 = inlined_call_operand.vmem [shape: bf16[2,18,128], index: 0, kind: input, shape index: {}]
  %s1 = inlined_call_operand.hbm [shape: bf16[3,128,128], index: 1, kind: input, shape index: {}]
  %s2 = inlined_call_operand.vmem [shape: f32[1,128], index: 2, kind: input, shape index: {}]
  %s3 = inlined_call_operand.hbm [shape: f32[2,16,128], index: 3, kind: output, shape index: {}]
  %s4 = sld [smem:[#allocation0]]
  $region49: #{tpu_custom_call.1} parent=0
    _
  %s6 = ssub.s32 1, %s4
  %s7 = scalar_select 0, %s6, %s4
  $region1: #{tpu_custom_call.1} parent=0
    #allocation2 [shape = 'u8[98304]{0}', space=vmem, size = 0x18000, scoped, tag = 'input window, operand 1, single buffered']
    #allocation3 [shape = 's32[2]{0}', space=sflag, size = 0x8, scoped, tag = 'scoped memory for tpu_custom_call.1']
    #allocation4 [shape = 's32[2]{0}', space=sflag, size = 0x8, scoped, tag = 'scoped memory for tpu_custom_call.1']
    #allocation5 [shape = 'u8[16384]{0}', space=vmem, size = 0x4000, scoped, tag = 'output window, operand 0']
    %8 = vsyncpa [#allocation3], 0
    %9 = vsyncpa [#allocation4], 0
    %s10 = scalar_lea.sflag [#allocation4], 1
    %11 = vsyncpa %s10, 0
    loop: start=0, step=1, limit=4
    $region2: #{tpu_custom_call.1} parent=1 // loop_pre_header
      _
    $region3: #{tpu_custom_call.1} parent=1 // loop_header
      %s13 = sphi 0, %s17
      %p14 = scmp.ge.s32.totalorder %s13, 4
      %s23 = sphi 0, %s25
      %s26 = sphi 0, %s23
      %s27 = sphi 0, %s26
      %s43 = sphi 0, %s27
      %s47 = sphi 0, %s47
      %s49 = sphi 0, %s47
      %s50 = sphi 0, %s49
      %s64 = sphi 0, %s50
      %s68 = sphi 0, %s68
      %s70 = sphi 0, %s68
      %s71 = sphi 0, %s70
      %s85 = sphi 0, %s71
      %s91 = sphi 0, %s93
      %s94 = sphi 0, %s91
      %s95 = sphi 0, %s94
      %s111 = sphi 0, %s95
    $region4: #{tpu_custom_call.1} parent=1 // loop_header_branch
      %16 = sbr.rel (%p14) target = $region8
    $region5: #{tpu_custom_call.1} parent=1 // loop_body
      %s18 = ssub.s32 %s13, 1
      %s19 = ssub.s32 %s13, 2
      %s20 = sadd.s32 %s13, 1
      %s21 = ssub.s32 %s13, %s20
      %p22 = scmp.eq.s32.totalorder %s21, 0
      %s24 = sadd.s32 %s23, 1
      %s25 = scalar_select %p22, %s23, %s24
      %p28 = pneg %p22
      %p29 = scmp.eq.s32.totalorder %s13, 1
      %p30 = por %p28, %p29
      %p31 = scmp.ne.s32.totalorder %s23, %s26
      %p32 = scmp.eq.s32.totalorder %s13, 0
      %p33 = por %p31, %p32
      %p34 = scmp.ne.s32.totalorder %s23, %s26
      %p35 = scmp.eq.s32.totalorder %s18, 1
      %p36 = por %p34, %p35
      %p37 = scmp.ne.s32.totalorder %s26, %s27
      %p38 = scmp.eq.s32.totalorder %s18, 0
      %p39 = por %p37, %p38
      %p40 = scmp.ne.s32.totalorder %s26, %s27
      %p41 = scmp.eq.s32.totalorder %s19, 1
      %p42 = por %p40, %p41
      %p44 = scmp.ne.s32.totalorder %s27, %s43
      %p45 = scmp.eq.s32.totalorder %s19, 0
      %p46 = por %p44, %p45
      %s48 = sadd.s32 %s47, 1
      %p51 = scmp.eq.s32.totalorder %s13, 1
      %p52 = scmp.ne.s32.totalorder %s47, %s49
      %p53 = scmp.eq.s32.totalorder %s13, 0
      %p54 = por %p52, %p53
      %p55 = scmp.ne.s32.totalorder %s47, %s49
      %p56 = scmp.eq.s32.totalorder %s18, 1
      %p57 = por %p55, %p56
      %p58 = scmp.ne.s32.totalorder %s49, %s50
      %p59 = scmp.eq.s32.totalorder %s18, 0
      %p60 = por %p58, %p59
      %p61 = scmp.ne.s32.totalorder %s49, %s50
      %p62 = scmp.eq.s32.totalorder %s19, 1
      %p63 = por %p61, %p62
      %p65 = scmp.ne.s32.totalorder %s50, %s64
      %p66 = scmp.eq.s32.totalorder %s19, 0
      %p67 = por %p65, %p66
      %s69 = sadd.s32 %s68, 1
      %p72 = scmp.eq.s32.totalorder %s13, 1
      %p73 = scmp.ne.s32.totalorder %s68, %s70
      %p74 = scmp.eq.s32.totalorder %s13, 0
      %p75 = por %p73, %p74
      %p76 = scmp.ne.s32.totalorder %s68, %s70
      %p77 = scmp.eq.s32.totalorder %s18, 1
      %p78 = por %p76, %p77
      %p79 = scmp.ne.s32.totalorder %s70, %s71
      %p80 = scmp.eq.s32.totalorder %s18, 0
      %p81 = por %p79, %p80
      %p82 = scmp.ne.s32.totalorder %s70, %s71
      %p83 = scmp.eq.s32.totalorder %s19, 1
      %p84 = por %p82, %p83
      %p86 = scmp.ne.s32.totalorder %s71, %s85
      %p87 = scmp.eq.s32.totalorder %s19, 0
      %p88 = por %p86, %p87
      %s89 = ssub.s32 %s13, %s20
      %p90 = scmp.eq.s32.totalorder %s89, 0
      %s92 = sadd.s32 %s91, 1
      %s93 = scalar_select %p90, %s91, %s92
      %p96 = pneg %p90
      %p97 = scmp.eq.s32.totalorder %s13, 1
      %p98 = por %p96, %p97
      %p99 = scmp.ne.s32.totalorder %s91, %s94
      %p100 = scmp.eq.s32.totalorder %s13, 0
      %p101 = por %p99, %p100
      %p102 = scmp.ne.s32.totalorder %s91, %s94
      %p103 = scmp.eq.s32.totalorder %s18, 1
      %p104 = por %p102, %p103
      %p105 = scmp.ne.s32.totalorder %s94, %s95
      %p106 = scmp.eq.s32.totalorder %s18, 0
      %p107 = por %p105, %p106
      %p108 = scmp.ne.s32.totalorder %s94, %s95
      %p109 = scmp.eq.s32.totalorder %s19, 1
      %p110 = por %p108, %p109
      %p112 = scmp.ne.s32.totalorder %s95, %s111
      %p113 = scmp.eq.s32.totalorder %s19, 0
      %p114 = por %p112, %p113
      %p115 = scmp.le.s32.totalorder 1, %s13
      %p116 = scmp.lt.s32.totalorder %s13, 3
      %p117 = pnand %p115, %p116
      %p118 = pneg %p117
      // Predicated region
      $region9: #{tpu_custom_call.1} parent=5 // pred_check
        _
      $region10: #{tpu_custom_call.1} parent=5 // pred_check_branch
        %120 = sbr.rel (%p117) target = $region12
      $region11: #{tpu_custom_call.1} parent=5 // pred_region
        %s121 = ssub.s32 %s13, 1
        // Predicated region
        $region13: #{tpu_custom_call.1} parent=11 // pred_check
          %p122 = pneg %p60
        $region14: #{tpu_custom_call.1} parent=11 // pred_check_branch
          %124 = sbr.rel (%p122) target = $region16
        $region15: #{tpu_custom_call.1} parent=11 // pred_region
          %126 = vsyncadd [#allocation3], 0
          %s127 = sshll.u32 %s1, 4
          %s128 = int_to_ptr.hbm [resolvable:$true] %s127
          %s129 = sshll.u32 [#allocation2], 4
          %s130 = int_to_ptr.vmem [resolvable:$true] %s129
          %135 = dma.hbm_to_vmem [thread:$0]  %s128, 3072, %s130, [#allocation3], 64, 64, 4
        $region16: #{tpu_custom_call.1} parent=11 // pred_fallthru
          _
        // Predicated region
        $region17: #{tpu_custom_call.1} parent=11 // pred_check
          %p136 = pneg %p81
        $region18: #{tpu_custom_call.1} parent=11 // pred_check_branch
          %138 = sbr.rel (%p136) target = $region20
        $region19: #{tpu_custom_call.1} parent=11 // pred_region
          _
        $region20: #{tpu_custom_call.1} parent=11 // pred_fallthru
          _
      $region12: #{tpu_custom_call.1} parent=5 // pred_fallthru
        _
      %p139 = scmp.lt.s32.totalorder %s13, 2
      // Predicated region
      $region21: #{tpu_custom_call.1} parent=5 // pred_check
        %p140 = pneg %p139
      $region22: #{tpu_custom_call.1} parent=5 // pred_check_branch
        %142 = sbr.rel (%p140) target = $region24
      $region23: #{tpu_custom_call.1} parent=5 // pred_region
        // Predicated region
        $region25: #{tpu_custom_call.1} parent=23 // pred_check
          %p143 = pneg %p33
        $region26: #{tpu_custom_call.1} parent=23 // pred_check_branch
          %145 = sbr.rel (%p143) target = $region28
        $region27: #{tpu_custom_call.1} parent=23 // pred_region
          %p146 = scmp.lt.s32.totalorder %s13, 1
          %s147 = scalar_select %p146, %s13, 1
          %s148 = smul.addr %s147, 3
          %s149 = smul.addr %s148, 4
          %s150 = scalar_lea.vmem %s0, %s149
        $region28: #{tpu_custom_call.1} parent=23 // pred_fallthru
          _
      $region24: #{tpu_custom_call.1} parent=5 // pred_fallthru
        _
      %p151 = scmp.le.s32.totalorder 1, %s13
      %p152 = scmp.lt.s32.totalorder %s13, 3
      %p153 = pnand %p151, %p152
      %p154 = pneg %p153
      // Predicated region
      $region29: #{tpu_custom_call.1} parent=5 // pred_check
        _
      $region30: #{tpu_custom_call.1} parent=5 // pred_check_branch
        %156 = sbr.rel (%p153) target = $region32
      $region31: #{tpu_custom_call.1} parent=5 // pred_region
        %s157 = ssub.s32 %s13, 1
        // Predicated region
        $region33: #{tpu_custom_call.1} parent=31 // pred_check
          %p158 = pneg %p60
        $region34: #{tpu_custom_call.1} parent=31 // pred_check_branch
          %160 = sbr.rel (%p158) target = $region36
        $region35: #{tpu_custom_call.1} parent=31 // pred_region
          %162 = dma.done [#allocation3], 3072
        $region36: #{tpu_custom_call.1} parent=31 // pred_fallthru
          _
        %p163 = scmp.lt.s32.totalorder %s18, 1
        %s164 = scalar_select %p163, %s18, 1
        %s165 = smul.addr %s164, 3
        %s166 = smul.addr %s165, 4
        %s167 = scalar_lea.vmem %s0, %s166
        %p168 = pneg %p39
        %p169 = pneg %p36
        %p170 = pneg %p60
        %p171 = pneg %p57
        %p172 = pneg %p81
        %p173 = pneg %p78
        %p174 = pneg %p107
        %p175 = pneg %p104
        %s176 = sand.u32 %s94, 1
        %s177 = scalar_lea.sflag [#allocation4], %s176
        %s178 = sand.u32 %s94, 1
        %s179 = smul.addr %s178, 16
        %s180 = scalar_lea.vmem [#allocation5], %s179
        %p181 = scmp.lt.s32.totalorder %s18, 1
        %s182 = scalar_select %p181, %s18, 1
        %s183 = smul.addr %s182, 3
        %s184 = smul.addr %s183, 4
        %s185 = scalar_lea.vmem %s0, %s184
        %v186 = vld [vmem:[%s185] sm:$0xf]
        %v187 = vld [vmem:[%s185 + $0x4] sm:$0xf]
        %v188 = vld [vmem:[%s185 + $0x8] sm:$0x1]
        %v189 = vld [vmem:[#allocation2] sm:$0xf]
        %v190 = vld [vmem:[#allocation2 + $0x4] sm:$0xf]
        %v191 = vld [vmem:[#allocation2 + $0x8] sm:$0xf]
        %v192 = vld [vmem:[#allocation2 + $0xc] sm:$0xf]
        %v193 = vld [vmem:[#allocation2 + $0x10] sm:$0xf]
        %v194 = vld [vmem:[#allocation2 + $0x14] sm:$0xf]
        %v195 = vld [vmem:[#allocation2 + $0x18] sm:$0xf]
        %v196 = vld [vmem:[#allocation2 + $0x1c] sm:$0xf]
        %v197 = vld [vmem:[#allocation2 + $0x20] sm:$0xf]
        %v198 = vld [vmem:[#allocation2 + $0x24] sm:$0xf]
        %v199 = vld [vmem:[#allocation2 + $0x28] sm:$0xf]
        %v200 = vld [vmem:[#allocation2 + $0x2c] sm:$0xf]
        %v201 = vld [vmem:[#allocation2 + $0x30] sm:$0xf]
        %v202 = vld [vmem:[#allocation2 + $0x34] sm:$0xf]
        %v203 = vld [vmem:[#allocation2 + $0x38] sm:$0xf]
        %v204 = vld [vmem:[#allocation2 + $0x3c] sm:$0xf]
        %s205 = scalar_lea.vmem [#allocation2], 64
        %v206 = vld [vmem:[%s205] sm:$0xf]
        %v207 = vld [vmem:[%s205 + $0x4] sm:$0xf]
        %v208 = vld [vmem:[%s205 + $0x8] sm:$0xf]
        %v209 = vld [vmem:[%s205 + $0xc] sm:$0xf]
        %v210 = vld [vmem:[%s205 + $0x10] sm:$0xf]
        %v211 = vld [vmem:[%s205 + $0x14] sm:$0xf]
        %v212 = vld [vmem:[%s205 + $0x18] sm:$0xf]
        %v213 = vld [vmem:[%s205 + $0x1c] sm:$0xf]
        %v214 = vld [vmem:[%s205 + $0x20] sm:$0xf]
        %v215 = vld [vmem:[%s205 + $0x24] sm:$0xf]
        %v216 = vld [vmem:[%s205 + $0x28] sm:$0xf]
        %v217 = vld [vmem:[%s205 + $0x2c] sm:$0xf]
        %v218 = vld [vmem:[%s205 + $0x30] sm:$0xf]
        %v219 = vld [vmem:[%s205 + $0x34] sm:$0xf]
        %v220 = vld [vmem:[%s205 + $0x38] sm:$0xf]
        %v221 = vld [vmem:[%s205 + $0x3c] sm:$0xf]
        %v225 = vunpack.c.l.b16 %v186
        %v226 = vunpack.c.l.b16 %v187
        %v227 = vunpack.c.l.b16 %v188
        %v228 = vpack.c.b16 %v226, %v225
        %v229 = vpack.c.b16 %v227, %v227
        %vm230 = vsmask.f32 7424
        %v232 = vshrl.u32 %v228, 16
        %v234 = vshll.u32 %v228, 16
        %v236 = vrot.slane %v234, 1
        %v237 = vor.u32 %v232, %v236
        %v239 = vshll.u32 %v229, 16
        %v241 = vrot.slane %v239, 1
        %v242 = vsel %vm230, %v237, %v241
        %v260 = vunpack.c.l.b16 %v206
        %v261 = vunpack.c.l.b16 %v207
        %v262 = vunpack.c.l.b16 %v208
        %v263 = vunpack.c.l.b16 %v209
        %v264 = vunpack.c.l.b16 %v210
        %v265 = vunpack.c.l.b16 %v211
        %v266 = vunpack.c.l.b16 %v212
        %v267 = vunpack.c.l.b16 %v213
        %v268 = vunpack.c.l.b16 %v214
        %v269 = vunpack.c.l.b16 %v215
        %v270 = vunpack.c.l.b16 %v216
        %v271 = vunpack.c.l.b16 %v217
        %v272 = vunpack.c.l.b16 %v218
        %v273 = vunpack.c.l.b16 %v219
        %v274 = vunpack.c.l.b16 %v220
        %v275 = vunpack.c.l.b16 %v221
        %v276 = vpack.c.b16 %v261, %v260
        %v277 = vpack.c.b16 %v263, %v262
        %v278 = vpack.c.b16 %v265, %v264
        %v279 = vpack.c.b16 %v267, %v266
        %v280 = vpack.c.b16 %v269, %v268
        %v281 = vpack.c.b16 %v271, %v270
        %v282 = vpack.c.b16 %v273, %v272
        %v283 = vpack.c.b16 %v275, %v274
        %292 = vmatpush.bf16.msra.mxu0 %v283
        %293 = vmatpush.bf16.msra.mxu0 %v282
        %294 = vmatpush.bf16.msra.mxu0 %v281
        %295 = vmatpush.bf16.msra.mxu0 %v280
        %296 = vmatpush.bf16.msra.mxu0 %v279
        %297 = vmatpush.bf16.msra.mxu0 %v278
        %298 = vmatpush.bf16.msra.mxu0 %v277
        %299 = vmatpush.bf16.msra.mxu0 %v276
        %300 = vmatmul.bf16.gmra.mxu0 %v242
        %v301 = vpop.f32.mrf.mxu0
        %v302 = vadd.f32 0.0, %v301
        %v303 = vpop.f32.mrf.mxu0
        %v304 = vadd.f32 0.0, %v303
        %305 = vdwg.mxu0
        %v323 = vunpack.c.l.b16 %v189
        %v324 = vunpack.c.l.b16 %v190
        %v325 = vunpack.c.l.b16 %v191
        %v326 = vunpack.c.l.b16 %v192
        %v327 = vunpack.c.l.b16 %v193
        %v328 = vunpack.c.l.b16 %v194
        %v329 = vunpack.c.l.b16 %v195
        %v330 = vunpack.c.l.b16 %v196
        %v331 = vunpack.c.l.b16 %v197
        %v332 = vunpack.c.l.b16 %v198
        %v333 = vunpack.c.l.b16 %v199
        %v334 = vunpack.c.l.b16 %v200
        %v335 = vunpack.c.l.b16 %v201
        %v336 = vunpack.c.l.b16 %v202
        %v337 = vunpack.c.l.b16 %v203
        %v338 = vunpack.c.l.b16 %v204
        %v339 = vpack.c.b16 %v324, %v323
        %v340 = vpack.c.b16 %v326, %v325
        %v341 = vpack.c.b16 %v328, %v327
        %v342 = vpack.c.b16 %v330, %v329
        %v343 = vpack.c.b16 %v332, %v331
        %v344 = vpack.c.b16 %v334, %v333
        %v345 = vpack.c.b16 %v336, %v335
        %v346 = vpack.c.b16 %v338, %v337
        %355 = vmatpush.bf16.msra.mxu0 %v346
        %356 = vmatpush.bf16.msra.mxu0 %v345
        %357 = vmatpush.bf16.msra.mxu0 %v344
        %358 = vmatpush.bf16.msra.mxu0 %v343
        %359 = vmatpush.bf16.msra.mxu0 %v342
        %360 = vmatpush.bf16.msra.mxu0 %v341
        %361 = vmatpush.bf16.msra.mxu0 %v340
        %362 = vmatpush.bf16.msra.mxu0 %v339
        %363 = vmatmul.bf16.gmra.mxu0 %v228
        %v364 = vpop.f32.mrf.mxu0
        %v365 = vadd.f32 %v302, %v364
        %v366 = vpop.f32.mrf.mxu0
        %v367 = vadd.f32 %v304, %v366
        %368 = vdwg.mxu0
        %s369 = scalar_lea.vmem [#allocation2], 128
        %v370 = vld [vmem:[%s369] sm:$0xf]
        %v371 = vld [vmem:[%s369 + $0x4] sm:$0xf]
        %v372 = vld [vmem:[%s369 + $0x8] sm:$0xf]
        %v373 = vld [vmem:[%s369 + $0xc] sm:$0xf]
        %v374 = vld [vmem:[%s369 + $0x10] sm:$0xf]
        %v375 = vld [vmem:[%s369 + $0x14] sm:$0xf]
        %v376 = vld [vmem:[%s369 + $0x18] sm:$0xf]
        %v377 = vld [vmem:[%s369 + $0x1c] sm:$0xf]
        %v378 = vld [vmem:[%s369 + $0x20] sm:$0xf]
        %v379 = vld [vmem:[%s369 + $0x24] sm:$0xf]
        %v380 = vld [vmem:[%s369 + $0x28] sm:$0xf]
        %v381 = vld [vmem:[%s369 + $0x2c] sm:$0xf]
        %v382 = vld [vmem:[%s369 + $0x30] sm:$0xf]
        %v383 = vld [vmem:[%s369 + $0x34] sm:$0xf]
        %v384 = vld [vmem:[%s369 + $0x38] sm:$0xf]
        %v385 = vld [vmem:[%s369 + $0x3c] sm:$0xf]
        %vm386 = vcmask 1046528
        %v387 = vrot.slane %v228, 1
        %v388 = vrot.slane %v229, 1
        %v389 = vsel %vm386, %v387, %v388
        %v407 = vunpack.c.l.b16 %v370
        %v408 = vunpack.c.l.b16 %v371
        %v409 = vunpack.c.l.b16 %v372
        %v410 = vunpack.c.l.b16 %v373
        %v411 = vunpack.c.l.b16 %v374
        %v412 = vunpack.c.l.b16 %v375
        %v413 = vunpack.c.l.b16 %v376
        %v414 = vunpack.c.l.b16 %v377
        %v415 = vunpack.c.l.b16 %v378
        %v416 = vunpack.c.l.b16 %v379
        %v417 = vunpack.c.l.b16 %v380
        %v418 = vunpack.c.l.b16 %v381
        %v419 = vunpack.c.l.b16 %v382
        %v420 = vunpack.c.l.b16 %v383
        %v421 = vunpack.c.l.b16 %v384
        %v422 = vunpack.c.l.b16 %v385
        %v423 = vpack.c.b16 %v408, %v407
        %v424 = vpack.c.b16 %v410, %v409
        %v425 = vpack.c.b16 %v412, %v411
        %v426 = vpack.c.b16 %v414, %v413
        %v427 = vpack.c.b16 %v416, %v415
        %v428 = vpack.c.b16 %v418, %v417
        %v429 = vpack.c.b16 %v420, %v419
        %v430 = vpack.c.b16 %v422, %v421
        %439 = vmatpush.bf16.msra.mxu0 %v430
        %440 = vmatpush.bf16.msra.mxu0 %v429
        %441 = vmatpush.bf16.msra.mxu0 %v428
        %442 = vmatpush.bf16.msra.mxu0 %v427
        %443 = vmatpush.bf16.msra.mxu0 %v426
        %444 = vmatpush.bf16.msra.mxu0 %v425
        %445 = vmatpush.bf16.msra.mxu0 %v424
        %446 = vmatpush.bf16.msra.mxu0 %v423
        %447 = vmatmul.bf16.gmra.mxu0 %v389
        %v448 = vpop.f32.mrf.mxu0
        %v449 = vadd.f32 0.0, %v448
        %v450 = vpop.f32.mrf.mxu0
        %v451 = vadd.f32 0.0, %v450
        %452 = vdwg.mxu0
        %v453 = vadd.f32 %v365, %v449
        %v454 = vadd.f32 %v367, %v451
        %v455 = vld [vmem:[%s2] sm:$0x1]
        %v457 = vperm.slane %v455, 0
        %v459 = vadd.f32 %v453, %v457
        %v460 = vadd.f32 %v454, %v457
        %461 = vst [vmem:[%s180] sm:$0xff] %v459
        %462 = vst [vmem:[%s180 + $0x8] sm:$0xff] %v460
        %s463 = sand.u32 %s94, 1
        %s464 = scalar_lea.sflag [#allocation4], %s463
        %s465 = sand.u32 %s94, 1
        %s466 = smul.addr %s465, 16
        %s467 = scalar_lea.vmem [#allocation5], %s466
        // Predicated region
        $region37: #{tpu_custom_call.1} parent=31 // pred_check
          %p468 = pneg %p104
        $region38: #{tpu_custom_call.1} parent=31 // pred_check_branch
          %470 = sbr.rel (%p468) target = $region40
        $region39: #{tpu_custom_call.1} parent=31 // pred_region
          %472 = vsyncadd %s464, 0
          %s473 = smul.addr %s18, 2
          %s474 = smul.addr %s473, 8
          %s475 = scalar_lea.hbm %s3, %s474
          %s476 = sshll.u32 %s467, 4
          %s477 = int_to_ptr.vmem [resolvable:$true] %s476
          %s478 = sshll.u32 %s475, 4
          %s479 = int_to_ptr.hbm [resolvable:$true] %s478
          %484 = dma.vmem_to_hbm [thread:$0]  %s477, 256, %s479, %s464, 128, 128, 8
        $region40: #{tpu_custom_call.1} parent=31 // pred_fallthru
          _
      $region32: #{tpu_custom_call.1} parent=5 // pred_fallthru
        _
      %p485 = scmp.le.s32.totalorder 2, %s13
      // Predicated region
      $region41: #{tpu_custom_call.1} parent=5 // pred_check
        %p486 = pneg %p485
      $region42: #{tpu_custom_call.1} parent=5 // pred_check_branch
        %488 = sbr.rel (%p486) target = $region44
      $region43: #{tpu_custom_call.1} parent=5 // pred_region
        %s489 = ssub.s32 %s13, 2
        // Predicated region
        $region45: #{tpu_custom_call.1} parent=43 // pred_check
          %p490 = pneg %p110
        $region46: #{tpu_custom_call.1} parent=43 // pred_check_branch
          %492 = sbr.rel (%p490) target = $region48
        $region47: #{tpu_custom_call.1} parent=43 // pred_region
          %s493 = sand.u32 %s95, 1
          %s494 = scalar_lea.sflag [#allocation4], %s493
          %s495 = sand.u32 %s95, 1
          %s496 = smul.addr %s495, 16
          %s497 = scalar_lea.vmem [#allocation5], %s496
          %499 = dma.done %s494, 256
        $region48: #{tpu_custom_call.1} parent=43 // pred_fallthru
          _
      $region44: #{tpu_custom_call.1} parent=5 // pred_fallthru
        _
    $region6: #{tpu_custom_call.1} parent=1 // loop_footer
      %s17 = sadd.s32 1, %s13
    $region7: #{tpu_custom_call.1} parent=1 // loop_footer_branch
      %12 = sbr.rel target = $region3
    $region8: #{tpu_custom_call.1} parent=1 // loop_exit
      _
    %500 = vsyncpa [#allocation3], 1
    %s501 = scalar_lea.sflag [#allocation3], 1
    %502 = vsyncpa %s501, 1
    %503 = vsyncpa [#allocation4], 1
    %s504 = scalar_lea.sflag [#allocation4], 1
    %505 = vsyncpa %s504, 1

</llo_original>
